<compile_context>
chip_gen: v7x
topology: tpu7x:2x2x1
jax: 0.10.0
libtpu: 0.0.40
codegen_flags: <defaults>
</compile_context>

<pallas_src>
import jax
import jax.numpy as jnp
from jax.experimental import pallas as pl
from jax.experimental.pallas import tpu as pltpu

_TM_MAX = 1024  # batch-tile rows per grid step once the batch gets large
                # (1024 x 784 fp32 activations = 3.2 MB, double-buffered 6.4 MB:
                #  well under the scoped VMEM limit on every generation)


def _mlp_kernel(x_ref, w1_ref, b1_ref, w2_ref, b2_ref, o_ref):
    # Layer 1: (tm, K) @ (K, H) + b1, ReLU.  f32 accumulation on the MXU.
    h = jnp.dot(x_ref[...], w1_ref[...], preferred_element_type=jnp.float32)
    h = jnp.maximum(h + b1_ref[...], 0.0)
    # Layer 2: (tm, H) @ (H, O) + b2  (no activation, matches the reference).
    o = jnp.dot(h, w2_ref[...], preferred_element_type=jnp.float32)
    o_ref[...] = (o + b2_ref[...]).astype(o_ref.dtype)


@jax.jit
def mlp_forward(params, x):
    """x: (B, C, H, W) fp32.  Returns (B, dim_out) fp32."""
    B = x.shape[0]
    K = x.shape[1] * x.shape[-2] * x.shape[-1]
    x2 = x.reshape(B, K)                       # == torch .view(-1, C*H*W)

    w1, b1 = params["w1"], params["b1"]        # (K, H), (H,)
    w2, b2 = params["w2"], params["b2"]        # (H, O), (O,)
    H = w1.shape[1]
    O = w2.shape[1]

    # Batch tiling: one full-extent tile for small B (block == full dim is
    # always legal); for big batches use _TM_MAX-row tiles (divisible by 8).
    if B <= _TM_MAX:
        tm, Bp = B, B
    else:
        tm = _TM_MAX
        Bp = pl.cdiv(B, tm) * tm
        x2 = jnp.pad(x2, ((0, Bp - B), (0, 0)))

    out = pl.pallas_call(
        _mlp_kernel,
        out_shape=jax.ShapeDtypeStruct((Bp, O), jnp.float32),
        grid_spec=pltpu.PrefetchScalarGridSpec(
            num_scalar_prefetch=0,
            grid=(Bp // tm,),
            in_specs=[
                pl.BlockSpec((tm, K), lambda i: (i, 0)),   # activations
                pl.BlockSpec((K, H), lambda i: (0, 0)),    # w1 (VMEM resident)
                pl.BlockSpec((1, H), lambda i: (0, 0)),    # b1
                pl.BlockSpec((H, O), lambda i: (0, 0)),    # w2 (VMEM resident)
                pl.BlockSpec((1, O), lambda i: (0, 0)),    # b2
            ],
            out_specs=pl.BlockSpec((tm, O), lambda i: (i, 0)),
        ),
        compiler_params=pltpu.CompilerParams(
            dimension_semantics=("parallel",)),
    )(x2, w1, b1.reshape(1, H), w2, b2.reshape(1, O))
    return out[:B]


def init_params(key, dim_in=28 * 28, dim_hidden=64, dim_out=10):
    """Matches torch.nn.Linear default init (uniform +/- 1/sqrt(fan_in))."""
    k1, k2, k3, k4 = jax.random.split(key, 4)
    s1 = 1.0 / jnp.sqrt(jnp.float32(dim_in))
    s2 = 1.0 / jnp.sqrt(jnp.float32(dim_hidden))
    return {
        "w1": jax.random.uniform(k1, (dim_in, dim_hidden), jnp.float32, -s1, s1),
        "b1": jax.random.uniform(k2, (dim_hidden,), jnp.float32, -s1, s1),
        "w2": jax.random.uniform(k3, (dim_hidden, dim_out), jnp.float32, -s2, s2),
        "b2": jax.random.uniform(k4, (dim_out,), jnp.float32, -s2, s2),
    }


def _mlp_reference(params, x):
    """Pure-JAX reference (mirrors the PyTorch forward exactly)."""
    B = x.shape[0]
    x2 = x.reshape(B, -1)
    h = jnp.maximum(x2 @ params["w1"] + params["b1"], 0.0)
    return h @ params["w2"] + params["b2"]


if __name__ == "__main__":
    key = jax.random.PRNGKey(0)
    key, kx = jax.random.split(key)
    # MLP defaults: dim_in = 1*28*28 = 784, dim_hidden = 64, dim_out = 10.
    x = jax.random.normal(kx, (2, 1, 28, 28), jnp.float32)
    params = init_params(key)

    out = jax.block_until_ready(mlp_forward(params, x))
    assert out.shape == (2, 10), out.shape

    ref = _mlp_reference(params, x)
    assert bool(jnp.allclose(out, ref, atol=1e-4, rtol=1e-4)), "mismatch vs reference"
    print("KERNEL_OK")
</pallas_src>

<mosaic_0001>
module attributes {stable_mosaic.version = 11 : i64} {
  func.func @_mlp_kernel(%arg0: i32, %arg1: memref<2x784xf32, #tpu.memory_space<vmem>>, %arg2: memref<784x64xf32, #tpu.memory_space<vmem>>, %arg3: memref<1x64xf32, #tpu.memory_space<vmem>>, %arg4: memref<64x10xf32, #tpu.memory_space<vmem>>, %arg5: memref<1x10xf32, #tpu.memory_space<vmem>>, %arg6: memref<2x10xf32, #tpu.memory_space<vmem>>) attributes {dimension_semantics = [#tpu.dimension_semantics<parallel>], iteration_bounds = array<i64: 1>, scalar_prefetch = 0 : i64, scratch_operands = 0 : i64, tpu.core_type = #tpu.core_type<tc>, window_params = [{transform_indices = @transform_0, window_bounds = array<i64: 2, 784>}, {pipeline_mode = #tpu.pipeline_mode<synchronous>, transform_indices = @transform_1, window_bounds = array<i64: 784, 64>}, {pipeline_mode = #tpu.pipeline_mode<synchronous>, transform_indices = @transform_2, window_bounds = array<i64: 1, 64>}, {pipeline_mode = #tpu.pipeline_mode<synchronous>, transform_indices = @transform_3, window_bounds = array<i64: 64, 10>}, {pipeline_mode = #tpu.pipeline_mode<synchronous>, transform_indices = @transform_4, window_bounds = array<i64: 1, 10>}, {transform_indices = @transform_5, window_bounds = array<i64: 2, 10>}]} {
    %c0 = arith.constant 0 : index
    %c0_0 = arith.constant 0 : index
    %0 = vector.load %arg1[%c0, %c0_0] : memref<2x784xf32, #tpu.memory_space<vmem>>, vector<2x784xf32>
    %c0_1 = arith.constant 0 : index
    %c0_2 = arith.constant 0 : index
    %1 = vector.load %arg2[%c0_1, %c0_2] : memref<784x64xf32, #tpu.memory_space<vmem>>, vector<784x64xf32>
    %cst = arith.constant dense<0.000000e+00> : vector<2x64xf32>
    %2 = tpu.matmul %0, %1, %cst {dimension_numbers = #tpu.dot_dimension_numbers<[1], [0], [0], [1], [0, 0, 1, 1], [], []>} : vector<2x784xf32>, vector<784x64xf32>, vector<2x64xf32> -> vector<2x64xf32>
    %c0_3 = arith.constant 0 : index
    %c0_4 = arith.constant 0 : index
    %3 = vector.load %arg3[%c0_3, %c0_4] : memref<1x64xf32, #tpu.memory_space<vmem>>, vector<1x64xf32>
    %4 = vector.broadcast %3 : vector<1x64xf32> to vector<2x64xf32>
    %5 = arith.addf %2, %4 : vector<2x64xf32>
    %cst_5 = arith.constant 0.000000e+00 : f32
    %6 = vector.broadcast %cst_5 : f32 to vector<2x64xf32>
    %7 = arith.maximumf %5, %6 : vector<2x64xf32>
    %c0_6 = arith.constant 0 : index
    %c0_7 = arith.constant 0 : index
    %8 = vector.load %arg4[%c0_6, %c0_7] : memref<64x10xf32, #tpu.memory_space<vmem>>, vector<64x10xf32>
    %cst_8 = arith.constant dense<0.000000e+00> : vector<2x10xf32>
    %9 = tpu.matmul %7, %8, %cst_8 {dimension_numbers = #tpu.dot_dimension_numbers<[1], [0], [0], [1], [0, 0, 1, 1], [], []>} : vector<2x64xf32>, vector<64x10xf32>, vector<2x10xf32> -> vector<2x10xf32>
    %c0_9 = arith.constant 0 : index
    %c0_10 = arith.constant 0 : index
    %10 = vector.load %arg5[%c0_9, %c0_10] : memref<1x10xf32, #tpu.memory_space<vmem>>, vector<1x10xf32>
    %11 = vector.broadcast %10 : vector<1x10xf32> to vector<2x10xf32>
    %12 = arith.addf %9, %11 : vector<2x10xf32>
    %c0_11 = arith.constant 0 : index
    %c0_12 = arith.constant 0 : index
    %13 = vector.load %arg6[%c0_11, %c0_12] : memref<2x10xf32, #tpu.memory_space<vmem>>, vector<2x10xf32>
    tpu.vector_store %arg6[%c0_11, %c0_12], %12 {strides = array<i32>} : memref<2x10xf32, #tpu.memory_space<vmem>>, vector<2x10xf32>,
    return
  }
  func.func @transform_0(%arg0: i32) -> (i32, i32) {
    %c0_i32 = arith.constant 0 : i32
    %c0_i32_0 = arith.constant 0 : i32
    return %arg0, %c0_i32 : i32, i32
  }
  func.func @transform_1(%arg0: i32) -> (i32, i32) {
    %c0_i32 = arith.constant 0 : i32
    %c0_i32_0 = arith.constant 0 : i32
    %c0_i32_1 = arith.constant 0 : i32
    return %c0_i32, %c0_i32_0 : i32, i32
  }
  func.func @transform_2(%arg0: i32) -> (i32, i32) {
    %c0_i32 = arith.constant 0 : i32
    %c0_i32_0 = arith.constant 0 : i32
    %c0_i32_1 = arith.constant 0 : i32
    return %c0_i32, %c0_i32_0 : i32, i32
  }
  func.func @transform_3(%arg0: i32) -> (i32, i32) {
    %c0_i32 = arith.constant 0 : i32
    %c0_i32_0 = arith.constant 0 : i32
    %c0_i32_1 = arith.constant 0 : i32
    return %c0_i32, %c0_i32_0 : i32, i32
  }
  func.func @transform_4(%arg0: i32) -> (i32, i32) {
    %c0_i32 = arith.constant 0 : i32
    %c0_i32_0 = arith.constant 0 : i32
    %c0_i32_1 = arith.constant 0 : i32
    return %c0_i32, %c0_i32_0 : i32, i32
  }
  func.func @transform_5(%arg0: i32) -> (i32, i32) {
    %c0_i32 = arith.constant 0 : i32
    %c0_i32_0 = arith.constant 0 : i32
    return %arg0, %c0_i32 : i32, i32
  }
}

</mosaic_0001>

<llo_original>
// kernel: mlp_forward.1
$region0: #{mlp_forward.1}
  #allocation0 [shape = 'u32[]', space=smem, size = 0x4, offset = 0x4, fixed_abs, tag = 'smem constant byte address 0x4 - core index']
  #allocation1 [shape = 'u32[144,128]{1,0:T(1,128)}', space=vmem, size = 0x12000, scoped, tag = 'internal scratch']
  %s0 = inlined_call_operand.vmem [shape: f32[2,784], index: 0, kind: input, shape index: {}]
  %s1 = inlined_call_operand.vmem [shape: f32[784,64], index: 1, kind: input, shape index: {}]
  %s2 = inlined_call_operand.vmem [shape: f32[1,64], index: 2, kind: input, shape index: {}]
  %s3 = inlined_call_operand.vmem [shape: f32[64,10], index: 3, kind: input, shape index: {}]
  %s4 = inlined_call_operand.vmem [shape: f32[1,10], index: 4, kind: input, shape index: {}]
  %s5 = inlined_call_operand.hbm [shape: f32[2,10], index: 5, kind: output, shape index: {}]
  %s6 = sld [smem:[#allocation0]]
  $region30: #{mlp_forward.1} parent=0
    _
  %s8 = ssub.s32 1, %s6
  %s9 = scalar_select 0, %s8, %s6
  $region1: #{mlp_forward.1} parent=0
    #allocation2 [shape = 'u8[1024]{0}', space=vmem, size = 0x400, scoped, tag = 'output window, operand 0, single buffered']
    #allocation3 [shape = 's32[1]{0}', space=sflag, size = 0x4, scoped, tag = 'scoped memory for mlp_forward.1']
    %10 = vsyncpa [#allocation3], 0
    // Predicated region
    $region2: #{mlp_forward.1} parent=1 // pred_check
      _
    $region3: #{mlp_forward.1} parent=1 // pred_check_branch
      %12 = sbr.rel (0) target = $region5
    $region4: #{mlp_forward.1} parent=1 // pred_region
      _
    $region5: #{mlp_forward.1} parent=1 // pred_fallthru
      _
    // Predicated region
    $region6: #{mlp_forward.1} parent=1 // pred_check
      _
    $region7: #{mlp_forward.1} parent=1 // pred_check_branch
      %14 = sbr.rel (0) target = $region9
    $region8: #{mlp_forward.1} parent=1 // pred_region
      _
    $region9: #{mlp_forward.1} parent=1 // pred_fallthru
      _
    // Predicated region
    $region10: #{mlp_forward.1} parent=1 // pred_check
      _
    $region11: #{mlp_forward.1} parent=1 // pred_check_branch
      %16 = sbr.rel (0) target = $region13
    $region12: #{mlp_forward.1} parent=1 // pred_region
      _
    $region13: #{mlp_forward.1} parent=1 // pred_fallthru
      _
    // Predicated region
    $region14: #{mlp_forward.1} parent=1 // pred_check
      _
    $region15: #{mlp_forward.1} parent=1 // pred_check_branch
      %18 = sbr.rel (0) target = $region17
    $region16: #{mlp_forward.1} parent=1 // pred_region
      _
    $region17: #{mlp_forward.1} parent=1 // pred_fallthru
      _
    // Predicated region
    $region18: #{mlp_forward.1} parent=1 // pred_check
      _
    $region19: #{mlp_forward.1} parent=1 // pred_check_branch
      %20 = sbr.rel (0) target = $region21
    $region20: #{mlp_forward.1} parent=1 // pred_region
      _
    $region21: #{mlp_forward.1} parent=1 // pred_fallthru
      _
    %v21 = vld [vmem:[%s0] sm:$0xff]
    %v22 = vld [vmem:[%s0 + $0x8] sm:$0x3f]
    %v23 = vld [vmem:[%s1] sm:$0xff]
    %v24 = vld [vmem:[%s1 + $0x8] sm:$0xff]
    %v25 = vld [vmem:[%s1 + $0x10] sm:$0xff]
    %v26 = vld [vmem:[%s1 + $0x18] sm:$0xff]
    %v27 = vld [vmem:[%s1 + $0x20] sm:$0xff]
    %v28 = vld [vmem:[%s1 + $0x28] sm:$0xff]
    %v29 = vld [vmem:[%s1 + $0x30] sm:$0xff]
    %v30 = vld [vmem:[%s1 + $0x38] sm:$0xff]
    %v31 = vld [vmem:[%s1 + $0x40] sm:$0xff]
    %v32 = vld [vmem:[%s1 + $0x48] sm:$0xff]
    %v33 = vld [vmem:[%s1 + $0x50] sm:$0xff]
    %v34 = vld [vmem:[%s1 + $0x58] sm:$0xff]
    %v35 = vld [vmem:[%s1 + $0x60] sm:$0xff]
    %v36 = vld [vmem:[%s1 + $0x68] sm:$0xff]
    %v37 = vld [vmem:[%s1 + $0x70] sm:$0xff]
    %v38 = vld [vmem:[%s1 + $0x78] sm:$0xff]
    %v39 = vld [vmem:[%s1 + $0x80] sm:$0xff]
    %v40 = vld [vmem:[%s1 + $0x88] sm:$0xff]
    %v41 = vld [vmem:[%s1 + $0x90] sm:$0xff]
    %v42 = vld [vmem:[%s1 + $0x98] sm:$0xff]
    %v43 = vld [vmem:[%s1 + $0xa0] sm:$0xff]
    %v44 = vld [vmem:[%s1 + $0xa8] sm:$0xff]
    %v45 = vld [vmem:[%s1 + $0xb0] sm:$0xff]
    %v46 = vld [vmem:[%s1 + $0xb8] sm:$0xff]
    %v47 = vld [vmem:[%s1 + $0xc0] sm:$0xff]
    %v48 = vld [vmem:[%s1 + $0xc8] sm:$0xff]
    %v49 = vld [vmem:[%s1 + $0xd0] sm:$0xff]
    %v50 = vld [vmem:[%s1 + $0xd8] sm:$0xff]
    %v51 = vld [vmem:[%s1 + $0xe0] sm:$0xff]
    %v52 = vld [vmem:[%s1 + $0xe8] sm:$0xff]
    %v53 = vld [vmem:[%s1 + $0xf0] sm:$0xff]
    %v54 = vld [vmem:[%s1 + $0xf8] sm:$0xff]
    %v55 = vld [vmem:[%s1 + $0x100] sm:$0xff]
    %v56 = vld [vmem:[%s1 + $0x108] sm:$0xff]
    %v57 = vld [vmem:[%s1 + $0x110] sm:$0xff]
    %v58 = vld [vmem:[%s1 + $0x118] sm:$0xff]
    %v59 = vld [vmem:[%s1 + $0x120] sm:$0xff]
    %v60 = vld [vmem:[%s1 + $0x128] sm:$0xff]
    %v61 = vld [vmem:[%s1 + $0x130] sm:$0xff]
    %v62 = vld [vmem:[%s1 + $0x138] sm:$0xff]
    %v63 = vld [vmem:[%s1 + $0x140] sm:$0xff]
    %v64 = vld [vmem:[%s1 + $0x148] sm:$0xff]
    %v65 = vld [vmem:[%s1 + $0x150] sm:$0xff]
    %v66 = vld [vmem:[%s1 + $0x158] sm:$0xff]
    %v67 = vld [vmem:[%s1 + $0x160] sm:$0xff]
    %v68 = vld [vmem:[%s1 + $0x168] sm:$0xff]
    %v69 = vld [vmem:[%s1 + $0x170] sm:$0xff]
    %v70 = vld [vmem:[%s1 + $0x178] sm:$0xff]
    %v71 = vld [vmem:[%s1 + $0x180] sm:$0xff]
    %v72 = vld [vmem:[%s1 + $0x188] sm:$0xff]
    %v73 = vld [vmem:[%s1 + $0x190] sm:$0xff]
    %v74 = vld [vmem:[%s1 + $0x198] sm:$0xff]
    %v75 = vld [vmem:[%s1 + $0x1a0] sm:$0xff]
    %v76 = vld [vmem:[%s1 + $0x1a8] sm:$0xff]
    %v77 = vld [vmem:[%s1 + $0x1b0] sm:$0xff]
    %v78 = vld [vmem:[%s1 + $0x1b8] sm:$0xff]
    %v79 = vld [vmem:[%s1 + $0x1c0] sm:$0xff]
    %v80 = vld [vmem:[%s1 + $0x1c8] sm:$0xff]
    %v81 = vld [vmem:[%s1 + $0x1d0] sm:$0xff]
    %v82 = vld [vmem:[%s1 + $0x1d8] sm:$0xff]
    %v83 = vld [vmem:[%s1 + $0x1e0] sm:$0xff]
    %v84 = vld [vmem:[%s1 + $0x1e8] sm:$0xff]
    %v85 = vld [vmem:[%s1 + $0x1f0] sm:$0xff]
    %v86 = vld [vmem:[%s1 + $0x1f8] sm:$0xff]
    %v87 = vld [vmem:[%s1 + $0x200] sm:$0xff]
    %v88 = vld [vmem:[%s1 + $0x208] sm:$0xff]
    %v89 = vld [vmem:[%s1 + $0x210] sm:$0xff]
    %v90 = vld [vmem:[%s1 + $0x218] sm:$0xff]
    %v91 = vld [vmem:[%s1 + $0x220] sm:$0xff]
    %v92 = vld [vmem:[%s1 + $0x228] sm:$0xff]
    %v93 = vld [vmem:[%s1 + $0x230] sm:$0xff]
    %v94 = vld [vmem:[%s1 + $0x238] sm:$0xff]
    %v95 = vld [vmem:[%s1 + $0x240] sm:$0xff]
    %v96 = vld [vmem:[%s1 + $0x248] sm:$0xff]
    %v97 = vld [vmem:[%s1 + $0x250] sm:$0xff]
    %v98 = vld [vmem:[%s1 + $0x258] sm:$0xff]
    %v99 = vld [vmem:[%s1 + $0x260] sm:$0xff]
    %v100 = vld [vmem:[%s1 + $0x268] sm:$0xff]
    %v101 = vld [vmem:[%s1 + $0x270] sm:$0xff]
    %v102 = vld [vmem:[%s1 + $0x278] sm:$0xff]
    %v103 = vld [vmem:[%s1 + $0x280] sm:$0xff]
    %v104 = vld [vmem:[%s1 + $0x288] sm:$0xff]
    %v105 = vld [vmem:[%s1 + $0x290] sm:$0xff]
    %v106 = vld [vmem:[%s1 + $0x298] sm:$0xff]
    %v107 = vld [vmem:[%s1 + $0x2a0] sm:$0xff]
    %v108 = vld [vmem:[%s1 + $0x2a8] sm:$0xff]
    %v109 = vld [vmem:[%s1 + $0x2b0] sm:$0xff]
    %v110 = vld [vmem:[%s1 + $0x2b8] sm:$0xff]
    %v111 = vld [vmem:[%s1 + $0x2c0] sm:$0xff]
    %v112 = vld [vmem:[%s1 + $0x2c8] sm:$0xff]
    %v113 = vld [vmem:[%s1 + $0x2d0] sm:$0xff]
    %v114 = vld [vmem:[%s1 + $0x2d8] sm:$0xff]
    %v115 = vld [vmem:[%s1 + $0x2e0] sm:$0xff]
    %v116 = vld [vmem:[%s1 + $0x2e8] sm:$0xff]
    %v117 = vld [vmem:[%s1 + $0x2f0] sm:$0xff]
    %v118 = vld [vmem:[%s1 + $0x2f8] sm:$0xff]
    %v119 = vld [vmem:[%s1 + $0x300] sm:$0xff]
    %v120 = vld [vmem:[%s1 + $0x308] sm:$0xff]
    %v121 = vld [vmem:[%s2] sm:$0x1]
    %v123 = vlaneseq
    %v124 = vshrl.u32 %v123, 7
    %v125 = vsub.s32 0, %v124
    %v126 = vrot.slane %v121, %v125
    %v130 = vcombine.high %v21, %v21
    %v132 = vunpack.c.l.s4 1983009808
    %v133 = vunpack.c.0.s8 %v132
    %v134 = vlaneseq
    %v135 = vshrl.u32 %v134, 7
    %v136 = vsub.s32 %v133, %v135
    %v137 = vrot.slane %v21, %v136
    %v139 = vunpack.c.l.s4 1983009808
    %v140 = vunpack.c.0.s8 %v139
    %v141 = vlaneseq
    %v142 = vshrl.u32 %v141, 7
    %v143 = vsub.s32 %v140, %v142
    %v144 = vrot.slane %v130, %v143
    %v145 = vcombine.high %v137, %v137
    %v146 = vcombine.high %v144, %v144
    %v147 = vcombine.high %v22, %v22
    %v149 = vunpack.c.l.s4 1983009808
    %v150 = vunpack.c.0.s8 %v149
    %v151 = vlaneseq
    %v152 = vshrl.u32 %v151, 7
    %v153 = vsub.s32 %v150, %v152
    %v154 = vrot.slane %v22, %v153
    %v156 = vunpack.c.l.s4 1983009808
    %v157 = vunpack.c.0.s8 %v156
    %v158 = vlaneseq
    %v159 = vshrl.u32 %v158, 7
    %v160 = vsub.s32 %v157, %v159
    %v161 = vrot.slane %v147, %v160
    %v162 = vcombine.high %v154, %v154
    %vm169 = vcmask 130048
    %v170 = vsel %vm169, %v161, 0
    %172 = vmatprep.subr.mxu0 0.0
    %173 = vmatpush1.msra.mxu0 %v23
    %174 = vmatprep.subr.mxu0 0.0
    %175 = vmatpush1.msra.mxu0 %v24
    %176 = vmatprep.subr.mxu0 0.0
    %177 = vmatpush1.msra.mxu0 %v25
    %178 = vmatprep.subr.mxu0 0.0
    %179 = vmatpush1.msra.mxu0 %v26
    %180 = vmatprep.subr.mxu0 0.0
    %181 = vmatpush1.msra.mxu0 %v27
    %182 = vmatprep.subr.mxu0 0.0
    %183 = vmatpush1.msra.mxu0 %v28
    %184 = vmatprep.subr.mxu0 0.0
    %185 = vmatpush1.msra.mxu0 %v29
    %186 = vmatprep.subr.mxu0 0.0
    %187 = vmatpush1.msra.mxu0 %v30
    %188 = vmatprep.subr.mxu0 0.0
    %189 = vmatpush1.msra.mxu0 %v31
    %190 = vmatprep.subr.mxu0 0.0
    %191 = vmatpush1.msra.mxu0 %v32
    %192 = vmatprep.subr.mxu0 0.0
    %193 = vmatpush1.msra.mxu0 %v33
    %194 = vmatprep.subr.mxu0 0.0
    %195 = vmatpush1.msra.mxu0 %v34
    %196 = vmatprep.subr.mxu0 0.0
    %197 = vmatpush1.msra.mxu0 %v35
    %198 = vmatprep.subr.mxu0 0.0
    %199 = vmatpush1.msra.mxu0 %v36
    %200 = vmatprep.subr.mxu0 0.0
    %201 = vmatpush1.msra.mxu0 %v37
    %202 = vmatprep.subr.mxu0 0.0
    %203 = vmatpush1.msra.mxu0 %v38
    %204 = vmatprep.subr.mxu0 0.0
    %205 = vmatpush1.msra.mxu0 %v39
    %206 = vmatprep.subr.mxu0 0.0
    %207 = vmatpush1.msra.mxu0 %v40
    %208 = vmatprep.subr.mxu0 0.0
    %209 = vmatpush1.msra.mxu0 %v41
    %210 = vmatprep.subr.mxu0 0.0
    %211 = vmatpush1.msra.mxu0 %v42
    %212 = vmatprep.subr.mxu0 0.0
    %213 = vmatpush1.msra.mxu0 %v43
    %214 = vmatprep.subr.mxu0 0.0
    %215 = vmatpush1.msra.mxu0 %v44
    %216 = vmatprep.subr.mxu0 0.0
    %217 = vmatpush1.msra.mxu0 %v45
    %218 = vmatprep.subr.mxu0 0.0
    %219 = vmatpush1.msra.mxu0 %v46
    %220 = vmatprep.subr.mxu0 0.0
    %221 = vmatpush1.msra.mxu0 %v47
    %222 = vmatprep.subr.mxu0 0.0
    %223 = vmatpush1.msra.mxu0 %v48
    %224 = vmatprep.subr.mxu0 0.0
    %225 = vmatpush1.msra.mxu0 %v49
    %226 = vmatprep.subr.mxu0 0.0
    %227 = vmatpush1.msra.mxu0 %v50
    %228 = vmatprep.subr.mxu0 0.0
    %229 = vmatpush1.msra.mxu0 %v51
    %230 = vmatprep.subr.mxu0 0.0
    %231 = vmatpush1.msra.mxu0 %v52
    %232 = vmatprep.subr.mxu0 0.0
    %233 = vmatpush1.msra.mxu0 %v53
    %234 = vmatprep.subr.mxu0 0.0
    %235 = vmatpush1.msra.mxu0 %v54
    %236 = vmatprep.mubr.f32.mxu0 %v145
    %237 = vmatmul.mubr.f32.gmra.mrb[0].mxu0 %v137
    %v238 = vpop.f32.mrb[0].mxu0
    %v239 = vadd.f32 %v126, %v238
    %v240 = vpop.f32.mrb[0].mxu0
    %241 = vdwg.mxu0
    %242 = vmatprep.subr.mxu0 0.0
    %243 = vmatpush1.msra.mxu0 %v55
    %244 = vmatprep.subr.mxu0 0.0
    %245 = vmatpush1.msra.mxu0 %v56
    %246 = vmatprep.subr.mxu0 0.0
    %247 = vmatpush1.msra.mxu0 %v57
    %248 = vmatprep.subr.mxu0 0.0
    %249 = vmatpush1.msra.mxu0 %v58
    %250 = vmatprep.subr.mxu0 0.0
    %251 = vmatpush1.msra.mxu0 %v59
    %252 = vmatprep.subr.mxu0 0.0
    %253 = vmatpush1.msra.mxu0 %v60
    %254 = vmatprep.subr.mxu0 0.0
    %255 = vmatpush1.msra.mxu0 %v61
    %256 = vmatprep.subr.mxu0 0.0
    %257 = vmatpush1.msra.mxu0 %v62
    %258 = vmatprep.subr.mxu0 0.0
    %259 = vmatpush1.msra.mxu0 %v63
    %260 = vmatprep.subr.mxu0 0.0
    %261 = vmatpush1.msra.mxu0 %v64
    %262 = vmatprep.subr.mxu0 0.0
    %263 = vmatpush1.msra.mxu0 %v65
    %264 = vmatprep.subr.mxu0 0.0
    %265 = vmatpush1.msra.mxu0 %v66
    %266 = vmatprep.subr.mxu0 0.0
    %267 = vmatpush1.msra.mxu0 %v67
    %268 = vmatprep.subr.mxu0 0.0
    %269 = vmatpush1.msra.mxu0 %v68
    %270 = vmatprep.subr.mxu0 0.0
    %271 = vmatpush1.msra.mxu0 %v69
    %272 = vmatprep.subr.mxu0 0.0
    %273 = vmatpush1.msra.mxu0 %v70
    %274 = vmatprep.subr.mxu0 0.0
    %275 = vmatpush1.msra.mxu0 %v71
    %276 = vmatprep.subr.mxu0 0.0
    %277 = vmatpush1.msra.mxu0 %v72
    %278 = vmatprep.subr.mxu0 0.0
    %279 = vmatpush1.msra.mxu0 %v73
    %280 = vmatprep.subr.mxu0 0.0
    %281 = vmatpush1.msra.mxu0 %v74
    %282 = vmatprep.subr.mxu0 0.0
    %283 = vmatpush1.msra.mxu0 %v75
    %284 = vmatprep.subr.mxu0 0.0
    %285 = vmatpush1.msra.mxu0 %v76
    %286 = vmatprep.subr.mxu0 0.0
    %287 = vmatpush1.msra.mxu0 %v77
    %288 = vmatprep.subr.mxu0 0.0
    %289 = vmatpush1.msra.mxu0 %v78
    %290 = vmatprep.subr.mxu0 0.0
    %291 = vmatpush1.msra.mxu0 %v79
    %292 = vmatprep.subr.mxu0 0.0
    %293 = vmatpush1.msra.mxu0 %v80
    %294 = vmatprep.subr.mxu0 0.0
    %295 = vmatpush1.msra.mxu0 %v81
    %296 = vmatprep.subr.mxu0 0.0
    %297 = vmatpush1.msra.mxu0 %v82
    %298 = vmatprep.subr.mxu0 0.0
    %299 = vmatpush1.msra.mxu0 %v83
    %300 = vmatprep.subr.mxu0 0.0
    %301 = vmatpush1.msra.mxu0 %v84
    %302 = vmatprep.subr.mxu0 0.0
    %303 = vmatpush1.msra.mxu0 %v85
    %304 = vmatprep.subr.mxu0 0.0
    %305 = vmatpush1.msra.mxu0 %v86
    %306 = vmatprep.mubr.f32.mxu0 %v146
    %307 = vmatmul.mubr.f32.gmra.mrb[0].mxu0 %v144
    %v308 = vpop.f32.mrb[0].mxu0
    %v309 = vadd.f32 %v239, %v308
    %v310 = vpop.f32.mrb[0].mxu0
    %311 = vdwg.mxu0
    %312 = vmatprep.subr.mxu0 0.0
    %313 = vmatpush1.msra.mxu0 %v87
    %314 = vmatprep.subr.mxu0 0.0
    %315 = vmatpush1.msra.mxu0 %v88
    %316 = vmatprep.subr.mxu0 0.0
    %317 = vmatpush1.msra.mxu0 %v89
    %318 = vmatprep.subr.mxu0 0.0
    %319 = vmatpush1.msra.mxu0 %v90
    %320 = vmatprep.subr.mxu0 0.0
    %321 = vmatpush1.msra.mxu0 %v91
    %322 = vmatprep.subr.mxu0 0.0
    %323 = vmatpush1.msra.mxu0 %v92
    %324 = vmatprep.subr.mxu0 0.0
    %325 = vmatpush1.msra.mxu0 %v93
    %326 = vmatprep.subr.mxu0 0.0
    %327 = vmatpush1.msra.mxu0 %v94
    %328 = vmatprep.subr.mxu0 0.0
    %329 = vmatpush1.msra.mxu0 %v95
    %330 = vmatprep.subr.mxu0 0.0
    %331 = vmatpush1.msra.mxu0 %v96
    %332 = vmatprep.subr.mxu0 0.0
    %333 = vmatpush1.msra.mxu0 %v97
    %334 = vmatprep.subr.mxu0 0.0
    %335 = vmatpush1.msra.mxu0 %v98
    %336 = vmatprep.subr.mxu0 0.0
    %337 = vmatpush1.msra.mxu0 %v99
    %338 = vmatprep.subr.mxu0 0.0
    %339 = vmatpush1.msra.mxu0 %v100
    %340 = vmatprep.subr.mxu0 0.0
    %341 = vmatpush1.msra.mxu0 %v101
    %342 = vmatprep.subr.mxu0 0.0
    %343 = vmatpush1.msra.mxu0 %v102
    %344 = vmatprep.subr.mxu0 0.0
    %345 = vmatpush1.msra.mxu0 %v103
    %346 = vmatprep.subr.mxu0 0.0
    %347 = vmatpush1.msra.mxu0 %v104
    %348 = vmatprep.subr.mxu0 0.0
    %349 = vmatpush1.msra.mxu0 %v105
    %350 = vmatprep.subr.mxu0 0.0
    %351 = vmatpush1.msra.mxu0 %v106
    %352 = vmatprep.subr.mxu0 0.0
    %353 = vmatpush1.msra.mxu0 %v107
    %354 = vmatprep.subr.mxu0 0.0
    %355 = vmatpush1.msra.mxu0 %v108
    %356 = vmatprep.subr.mxu0 0.0
    %357 = vmatpush1.msra.mxu0 %v109
    %358 = vmatprep.subr.mxu0 0.0
    %359 = vmatpush1.msra.mxu0 %v110
    %360 = vmatprep.subr.mxu0 0.0
    %361 = vmatpush1.msra.mxu0 %v111
    %362 = vmatprep.subr.mxu0 0.0
    %363 = vmatpush1.msra.mxu0 %v112
    %364 = vmatprep.subr.mxu0 0.0
    %365 = vmatpush1.msra.mxu0 %v113
    %366 = vmatprep.subr.mxu0 0.0
    %367 = vmatpush1.msra.mxu0 %v114
    %368 = vmatprep.subr.mxu0 0.0
    %369 = vmatpush1.msra.mxu0 %v115
    %370 = vmatprep.subr.mxu0 0.0
    %371 = vmatpush1.msra.mxu0 %v116
    %372 = vmatprep.subr.mxu0 0.0
    %373 = vmatpush1.msra.mxu0 %v117
    %374 = vmatprep.subr.mxu0 0.0
    %375 = vmatpush1.msra.mxu0 %v118
    %376 = vmatprep.mubr.f32.mxu0 %v162
    %377 = vmatmul.mubr.f32.gmra.mrb[0].mxu0 %v154
    %v378 = vpop.f32.mrb[0].mxu0
    %v379 = vadd.f32 %v309, %v378
    %v380 = vpop.f32.mrb[0].mxu0
    %381 = vdwg.mxu0
    %382 = vmatprep.subr.mxu0 0.0
    %383 = vmatpush1.msra.mxu0 %v119
    %384 = vmatprep.subr.mxu0 0.0
    %385 = vmatpush1.msra.mxu0 %v120
    %386 = vmatprep.subr.mxu0 0.0
    %387 = vmatpush1.msra.mxu0 0.0
    %388 = vmatprep.subr.mxu0 0.0
    %389 = vmatpush1.msra.mxu0 0.0
    %390 = vmatprep.subr.mxu0 0.0
    %391 = vmatpush1.msra.mxu0 0.0
    %392 = vmatprep.subr.mxu0 0.0
    %393 = vmatpush1.msra.mxu0 0.0
    %394 = vmatprep.subr.mxu0 0.0
    %395 = vmatpush1.msra.mxu0 0.0
    %396 = vmatprep.subr.mxu0 0.0
    %397 = vmatpush1.msra.mxu0 0.0
    %398 = vmatprep.subr.mxu0 0.0
    %399 = vmatpush1.msra.mxu0 0.0
    %400 = vmatprep.subr.mxu0 0.0
    %401 = vmatpush1.msra.mxu0 0.0
    %402 = vmatprep.subr.mxu0 0.0
    %403 = vmatpush1.msra.mxu0 0.0
    %404 = vmatprep.subr.mxu0 0.0
    %405 = vmatpush1.msra.mxu0 0.0
    %406 = vmatprep.subr.mxu0 0.0
    %407 = vmatpush1.msra.mxu0 0.0
    %408 = vmatprep.subr.mxu0 0.0
    %409 = vmatpush1.msra.mxu0 0.0
    %410 = vmatprep.subr.mxu0 0.0
    %411 = vmatpush1.msra.mxu0 0.0
    %412 = vmatprep.subr.mxu0 0.0
    %413 = vmatpush1.msra.mxu0 0.0
    %414 = vmatprep.subr.mxu0 0.0
    %415 = vmatpush1.msra.mxu0 0.0
    %416 = vmatprep.subr.mxu0 0.0
    %417 = vmatpush1.msra.mxu0 0.0
    %418 = vmatprep.subr.mxu0 0.0
    %419 = vmatpush1.msra.mxu0 0.0
    %420 = vmatprep.subr.mxu0 0.0
    %421 = vmatpush1.msra.mxu0 0.0
    %422 = vmatprep.subr.mxu0 0.0
    %423 = vmatpush1.msra.mxu0 0.0
    %424 = vmatprep.subr.mxu0 0.0
    %425 = vmatpush1.msra.mxu0 0.0
    %426 = vmatprep.subr.mxu0 0.0
    %427 = vmatpush1.msra.mxu0 0.0
    %428 = vmatprep.subr.mxu0 0.0
    %429 = vmatpush1.msra.mxu0 0.0
    %430 = vmatprep.subr.mxu0 0.0
    %431 = vmatpush1.msra.mxu0 0.0
    %432 = vmatprep.subr.mxu0 0.0
    %433 = vmatpush1.msra.mxu0 0.0
    %434 = vmatprep.subr.mxu0 0.0
    %435 = vmatpush1.msra.mxu0 0.0
    %436 = vmatprep.subr.mxu0 0.0
    %437 = vmatpush1.msra.mxu0 0.0
    %438 = vmatprep.subr.mxu0 0.0
    %439 = vmatpush1.msra.mxu0 0.0
    %440 = vmatprep.subr.mxu0 0.0
    %441 = vmatpush1.msra.mxu0 0.0
    %442 = vmatprep.subr.mxu0 0.0
    %443 = vmatpush1.msra.mxu0 0.0
    %444 = vmatprep.subr.mxu0 0.0
    %445 = vmatpush1.msra.mxu0 0.0
    %446 = vmatprep.mubr.f32.mxu0 0.0
    %447 = vmatmul.mubr.f32.gmra.mrb[0].mxu0 %v170
    %v448 = vpop.f32.mrb[0].mxu0
    %v449 = vadd.f32 %v379, %v448
    %v450 = vpop.f32.mrb[0].mxu0
    %451 = vdwg.mxu0
    %v452 = vmax.f32 %v449, 0.0
    %v453 = vld [vmem:[%s3] sm:$0xff]
    %v454 = vld [vmem:[%s3 + $0x8] sm:$0xff]
    %v455 = vld [vmem:[%s3 + $0x10] sm:$0xff]
    %v456 = vld [vmem:[%s3 + $0x18] sm:$0xff]
    %v457 = vld [vmem:[%s3 + $0x20] sm:$0xff]
    %v458 = vld [vmem:[%s3 + $0x28] sm:$0xff]
    %v459 = vld [vmem:[%s3 + $0x30] sm:$0xff]
    %v460 = vld [vmem:[%s3 + $0x38] sm:$0xff]
    %v461 = vld [vmem:[%s4] sm:$0x1]
    %v463 = vlaneseq
    %v464 = vshrl.u32 %v463, 7
    %v465 = vsub.s32 0, %v464
    %v466 = vrot.slane %v461, %v465
    %vm468 = vcmask 523264
    %v470 = vsel %vm468, %v452, 0
    %472 = vmatprep.subr.mxu0 0.0
    %473 = vmatpush1.msra.mxu0 %v453
    %474 = vmatprep.subr.mxu0 0.0
    %475 = vmatpush1.msra.mxu0 %v454
    %476 = vmatprep.subr.mxu0 0.0
    %477 = vmatpush1.msra.mxu0 %v455
    %478 = vmatprep.subr.mxu0 0.0
    %479 = vmatpush1.msra.mxu0 %v456
    %480 = vmatprep.subr.mxu0 0.0
    %481 = vmatpush1.msra.mxu0 %v457
    %482 = vmatprep.subr.mxu0 0.0
    %483 = vmatpush1.msra.mxu0 %v458
    %484 = vmatprep.subr.mxu0 0.0
    %485 = vmatpush1.msra.mxu0 %v459
    %486 = vmatprep.subr.mxu0 0.0
    %487 = vmatpush1.msra.mxu0 %v460
    %488 = vmatprep.subr.mxu0 0.0
    %489 = vmatpush1.msra.mxu0 0.0
    %490 = vmatprep.subr.mxu0 0.0
    %491 = vmatpush1.msra.mxu0 0.0
    %492 = vmatprep.subr.mxu0 0.0
    %493 = vmatpush1.msra.mxu0 0.0
    %494 = vmatprep.subr.mxu0 0.0
    %495 = vmatpush1.msra.mxu0 0.0
    %496 = vmatprep.subr.mxu0 0.0
    %497 = vmatpush1.msra.mxu0 0.0
    %498 = vmatprep.subr.mxu0 0.0
    %499 = vmatpush1.msra.mxu0 0.0
    %500 = vmatprep.subr.mxu0 0.0
    %501 = vmatpush1.msra.mxu0 0.0
    %502 = vmatprep.subr.mxu0 0.0
    %503 = vmatpush1.msra.mxu0 0.0
    %504 = vmatprep.subr.mxu0 0.0
    %505 = vmatpush1.msra.mxu0 0.0
    %506 = vmatprep.subr.mxu0 0.0
    %507 = vmatpush1.msra.mxu0 0.0
    %508 = vmatprep.subr.mxu0 0.0
    %509 = vmatpush1.msra.mxu0 0.0
    %510 = vmatprep.subr.mxu0 0.0
    %511 = vmatpush1.msra.mxu0 0.0
    %512 = vmatprep.subr.mxu0 0.0
    %513 = vmatpush1.msra.mxu0 0.0
    %514 = vmatprep.subr.mxu0 0.0
    %515 = vmatpush1.msra.mxu0 0.0
    %516 = vmatprep.subr.mxu0 0.0
    %517 = vmatpush1.msra.mxu0 0.0
    %518 = vmatprep.subr.mxu0 0.0
    %519 = vmatpush1.msra.mxu0 0.0
    %520 = vmatprep.subr.mxu0 0.0
    %521 = vmatpush1.msra.mxu0 0.0
    %522 = vmatprep.subr.mxu0 0.0
    %523 = vmatpush1.msra.mxu0 0.0
    %524 = vmatprep.subr.mxu0 0.0
    %525 = vmatpush1.msra.mxu0 0.0
    %526 = vmatprep.subr.mxu0 0.0
    %527 = vmatpush1.msra.mxu0 0.0
    %528 = vmatprep.subr.mxu0 0.0
    %529 = vmatpush1.msra.mxu0 0.0
    %530 = vmatprep.subr.mxu0 0.0
    %531 = vmatpush1.msra.mxu0 0.0
    %532 = vmatprep.subr.mxu0 0.0
    %533 = vmatpush1.msra.mxu0 0.0
    %534 = vmatprep.subr.mxu0 0.0
    %535 = vmatpush1.msra.mxu0 0.0
    %536 = vmatprep.mubr.f32.mxu0 0.0
    %537 = vmatmul.mubr.f32.gmra.mrb[0].mxu0 %v470
    %v538 = vpop.f32.mrb[0].mxu0
    %v539 = vadd.f32 %v466, %v538
    %v540 = vpop.f32.mrb[0].mxu0
    %541 = vdwg.mxu0
    %vm542 = vcmask 74752
    %543 = vst.msk [vmem:[#allocation2] sm:$0x3] %vm542, %v539
    // Predicated region
    $region22: #{mlp_forward.1} parent=1 // pred_check
      _
    $region23: #{mlp_forward.1} parent=1 // pred_check_branch
      %545 = sbr.rel (0) target = $region25
    $region24: #{mlp_forward.1} parent=1 // pred_region
      %s547 = ssub.s32 32, 32
      %548 = vsyncadd [#allocation3], %s547
      %s550 = sshll.u32 [#allocation2], 4
      %s551 = int_to_ptr.vmem [resolvable:$true] %s550
      %553 = dma.vmem_to_hbm [thread:$0]  %s551, 32, %s5, [#allocation3]
    $region25: #{mlp_forward.1} parent=1 // pred_fallthru
      _
    // Predicated region
    $region26: #{mlp_forward.1} parent=1 // pred_check
      _
    $region27: #{mlp_forward.1} parent=1 // pred_check_branch
      %555 = sbr.rel (0) target = $region29
    $region28: #{mlp_forward.1} parent=1 // pred_region
      %556 = dma.done [#allocation3], 32
    $region29: #{mlp_forward.1} parent=1 // pred_fallthru
      _
    %557 = vsyncpa [#allocation3], 1

</llo_original>
